<compile_context>
chip_gen: v7x
topology: tpu7x:2x2x1
jax: 0.10.0
libtpu: 0.0.40
codegen_flags: <defaults>
</compile_context>

<pallas_src>
import jax
import jax.numpy as jnp
from jax.experimental import pallas as pl
from jax.experimental.pallas import tpu as pltpu


def _next_img_pred_kernel(x_ref, w_ref, b_ref, o_ref):
    """One batch tile of LogSoftmax(Linear(x, 2)) in the 2-class closed form.

    x_ref: (TB, H)  activations (native dtype; MXU accumulates in f32)
    w_ref: (1, H)   weight[:, 1] - weight[:, 0]  (lane-dense, resident in VMEM)
    b_ref: (1,)     SMEM scalar: bias[1] - bias[0]
    o_ref: (2, TB)  log-probabilities, lane-dense (row 0 = class 0, row 1 = class 1)
    """
    # d[0, b] = sum_h w_diff[h] * x[b, h]  -> lane-dense (1, TB), f32 accumulate.
    d = jax.lax.dot_general(
        w_ref[...], x_ref[...],
        dimension_numbers=(((1,), (1,)), ((), ())),
        preferred_element_type=jnp.float32,
    )
    d = d + b_ref[0]

    # Numerically stable softplus(d); softplus(-d) = softplus(d) - d.
    sp = jnp.maximum(d, 0.0) + jnp.log1p(jnp.exp(-jnp.abs(d)))
    #   log p(class 0) = -softplus(d)
    #   log p(class 1) = -softplus(-d) = d - softplus(d)
    o_ref[...] = jnp.concatenate([-sp, d - sp], axis=0).astype(o_ref.dtype)


def _vmem_plan():
    """Return (block_budget_bytes, vmem_limit_bytes) for the current TPU gen."""
    cap = 64 * 1024 * 1024              # conservative fallback = v7x per-TC physical
    try:
        cap = int(pltpu.get_tpu_info().vmem_capacity_bytes)
    except Exception:                   # non-TPU trace / interpret mode
        pass
    budget = min(cap // 2, 48 * 1024 * 1024)     # v5e/v6e: 48 MiB, v7x: 32 MiB
    limit = min(cap - (8 * 1024 * 1024), budget + (16 * 1024 * 1024))
    return budget, max(limit, 32 * 1024 * 1024)


def next_img_prediction(x, weight, bias, *, block_b=8192):
    """x: (B, H), weight: (H, 2), bias: (2,) -> (B, 2) f32 log-probs.

    weight is stored as (hidden, 2); PyTorch's nn.Linear stores (2, hidden) and
    computes x @ W.T — identical math.
    """
    B, H = x.shape
    itemsize = jnp.dtype(x.dtype).itemsize

    # Only the class difference matters for a 2-class log-softmax.
    w_diff = (weight[:, 1] - weight[:, 0]).reshape(1, H).astype(x.dtype)
    b_diff = (bias[1] - bias[0]).astype(jnp.float32).reshape(1)

    budget, vmem_limit = _vmem_plan()

    # Per-batch-row VMEM cost: double-buffered x row + padded f32 (2, tb) output.
    per_row = 2 * H * itemsize + 2 * 8 * 4
    w_resident = 2 * 8 * H * itemsize            # (1,H) pads to (8,H); worst case 2 bufs
    tb_cap = max(256, (budget - w_resident) // per_row)

    ALIGN = 256                                  # covers bf16 pack (16) & MXU M tile
    if B <= 2 * ALIGN:
        tb = B                                   # single full-extent tile: always legal
    else:
        tb = min(block_b, tb_cap, B)
        if B >= 4 * ALIGN:                       # keep >= ~4 tiles for v7x megacore
            tb = min(tb, pl.cdiv(B, 4))
        tb = max(ALIGN, (tb // ALIGN) * ALIGN)

    grid = (pl.cdiv(B, tb),)

    cost = pl.CostEstimate(
        flops=2 * B * H,
        transcendentals=2 * B,
        bytes_accessed=x.size * itemsize + w_diff.size * itemsize + B * 2 * 4,
    )

    out = pl.pallas_call(
        _next_img_pred_kernel,
        out_shape=jax.ShapeDtypeStruct((2, B), jnp.float32),
        grid_spec=pltpu.PrefetchScalarGridSpec(
            num_scalar_prefetch=0,
            grid=grid,
            in_specs=[
                pl.BlockSpec((tb, H), lambda i: (i, 0)),            # streamed x
                pl.BlockSpec((1, H), lambda i: (0, 0)),             # resident w_diff
                pl.BlockSpec(memory_space=pltpu.MemorySpace.SMEM),  # scalar bias diff
            ],
            out_specs=pl.BlockSpec((2, tb), lambda i: (0, i)),
        ),
        compiler_params=pltpu.CompilerParams(
            dimension_semantics=("parallel",),   # shard batch tiles across TCs (v7x)
            vmem_limit_bytes=vmem_limit,
        ),
        cost_estimate=cost,
    )(x, w_diff, b_diff)

    # Lane-dense (2, B) kernel output -> module's (B, 2) layout (tiny transpose).
    return out.T


if __name__ == "__main__":
    key = jax.random.PRNGKey(0)
    k_x, k_w, k_b = jax.random.split(key, 3)

    batch, hidden = 8, 32  # small shapes consistent with a BERT-style head
    x = jax.random.normal(k_x, (batch, hidden), dtype=jnp.float32)

    # nn.Linear(hidden, 2): PyTorch stores weight as (2, hidden); we keep (hidden, 2).
    bound = 1.0 / jnp.sqrt(hidden)
    weight = jax.random.uniform(k_w, (hidden, 2), jnp.float32, -bound, bound)
    bias = jax.random.uniform(k_b, (2,), jnp.float32, -bound, bound)

    out = next_img_prediction(x, weight, bias)
    out = jax.block_until_ready(out)

    # Reference in plain JAX (high-precision matmul so the check is about the kernel).
    logits = jnp.dot(x, weight, precision=jax.lax.Precision.HIGHEST) + bias
    ref = jax.nn.log_softmax(logits, axis=-1)
    assert out.shape == (batch, 2)
    assert jnp.allclose(out, ref, atol=1e-4, rtol=1e-4), float(
        jnp.max(jnp.abs(out - ref))
    )

    print("KERNEL_OK")
</pallas_src>

<mosaic_0001>
module attributes {stable_mosaic.version = 11 : i64} {
  func.func @_next_img_pred_kernel(%arg0: i32, %arg1: memref<8x32xf32, #tpu.memory_space<vmem>>, %arg2: memref<1x32xf32, #tpu.memory_space<vmem>>, %arg3: memref<1xf32, #tpu.memory_space<smem>>, %arg4: memref<2x8xf32, #tpu.memory_space<vmem>>) attributes {dimension_semantics = [#tpu.dimension_semantics<parallel>], iteration_bounds = array<i64: 1>, scalar_prefetch = 0 : i64, scratch_operands = 0 : i64, tpu.core_type = #tpu.core_type<tc>, window_params = [{transform_indices = @transform_0, window_bounds = array<i64: 8, 32>}, {pipeline_mode = #tpu.pipeline_mode<synchronous>, transform_indices = @transform_1, window_bounds = array<i64: 1, 32>}, {transform_indices = @transform_2, window_bounds = array<i64: 1>}, {transform_indices = @transform_3, window_bounds = array<i64: 2, 8>}]} {
    %c0 = arith.constant 0 : index
    %c0_0 = arith.constant 0 : index
    %0 = vector.load %arg2[%c0, %c0_0] : memref<1x32xf32, #tpu.memory_space<vmem>>, vector<1x32xf32>
    %c0_1 = arith.constant 0 : index
    %c0_2 = arith.constant 0 : index
    %1 = vector.load %arg1[%c0_1, %c0_2] : memref<8x32xf32, #tpu.memory_space<vmem>>, vector<8x32xf32>
    %cst = arith.constant dense<0.000000e+00> : vector<1x8xf32>
    %2 = tpu.matmul %0, %1, %cst {dimension_numbers = #tpu.dot_dimension_numbers<[1], [1], [0], [0], [0, 0, 1, 0], [], []>} : vector<1x32xf32>, vector<8x32xf32>, vector<1x8xf32> -> vector<1x8xf32>
    %c0_3 = arith.constant 0 : index
    %3 = memref.load %arg3[%c0_3] : memref<1xf32, #tpu.memory_space<smem>>
    %4 = vector.broadcast %3 : f32 to vector<1x8xf32>
    %5 = arith.addf %2, %4 : vector<1x8xf32>
    %cst_4 = arith.constant 0.000000e+00 : f32
    %6 = vector.broadcast %cst_4 : f32 to vector<1x8xf32>
    %7 = arith.maximumf %5, %6 : vector<1x8xf32>
    %8 = math.absf %5 : vector<1x8xf32>
    %cst_5 = arith.constant 0.000000e+00 : f32
    %9 = vector.broadcast %cst_5 : f32 to vector<1x8xf32>
    %10 = arith.subf %9, %8 : vector<1x8xf32>
    %11 = math.exp %10 : vector<1x8xf32>
    %12 = math.log1p %11 : vector<1x8xf32>
    %13 = arith.addf %7, %12 : vector<1x8xf32>
    %cst_6 = arith.constant 0.000000e+00 : f32
    %14 = vector.broadcast %cst_6 : f32 to vector<1x8xf32>
    %15 = arith.subf %14, %13 : vector<1x8xf32>
    %16 = arith.subf %5, %13 : vector<1x8xf32>
    %17 = tpu.concatenate %15, %16 in 0 : vector<1x8xf32>, vector<1x8xf32> -> vector<2x8xf32>
    %c0_7 = arith.constant 0 : index
    %c0_8 = arith.constant 0 : index
    %18 = vector.load %arg4[%c0_7, %c0_8] : memref<2x8xf32, #tpu.memory_space<vmem>>, vector<2x8xf32>
    tpu.vector_store %arg4[%c0_7, %c0_8], %17 {strides = array<i32>} : memref<2x8xf32, #tpu.memory_space<vmem>>, vector<2x8xf32>,
    return
  }
  func.func @transform_0(%arg0: i32) -> (i32, i32) {
    %c0_i32 = arith.constant 0 : i32
    %c0_i32_0 = arith.constant 0 : i32
    return %arg0, %c0_i32 : i32, i32
  }
  func.func @transform_1(%arg0: i32) -> (i32, i32) {
    %c0_i32 = arith.constant 0 : i32
    %c0_i32_0 = arith.constant 0 : i32
    %c0_i32_1 = arith.constant 0 : i32
    return %c0_i32, %c0_i32_0 : i32, i32
  }
  func.func @transform_2(%arg0: i32) -> i32 {
    %c0_i32 = arith.constant 0 : i32
    %c0_i32_0 = arith.constant 0 : i32
    return %c0_i32 : i32
  }
  func.func @transform_3(%arg0: i32) -> (i32, i32) {
    %c0_i32 = arith.constant 0 : i32
    %c0_i32_0 = arith.constant 0 : i32
    return %c0_i32, %arg0 : i32, i32
  }
}

</mosaic_0001>

<llo_original>
// kernel: tpu_custom_call.1
$region0: #{tpu_custom_call.1}
  #allocation0 [shape = 'u32[]', space=smem, size = 0x4, offset = 0x4, fixed_abs, tag = 'smem constant byte address 0x4 - core index']
  #allocation1 [shape = 'u32[144,128]{1,0:T(1,128)}', space=vmem, size = 0x12000, scoped, tag = 'internal scratch']
  #allocation2 [shape = 'f32[1]{0:T(128)S(6)}', space=smem, size = 0x200, scoped, tag = 'scoped memory for tpu_custom_call.1']
  %s0 = inlined_call_operand.hbm [shape: f32[8,32], index: 0, kind: input, shape index: {}]
  %s1 = inlined_call_operand.vmem [shape: f32[1,32], index: 1, kind: input, shape index: {}]
  %s2 = inlined_call_operand.<no memory space> [shape: f32[1], index: 2, kind: input, shape index: {}]
  %s3 = inlined_call_operand.hbm [shape: f32[2,8], index: 3, kind: output, shape index: {}]
  %s4 = sld [smem:[#allocation0]]
  $region26: #{tpu_custom_call.1} parent=0
    _
  %s6 = ssub.s32 1, %s4
  %s7 = scalar_select 0, %s6, %s4
  %8 = sst [smem:[#allocation2]] %s2
  $region1: #{tpu_custom_call.1} parent=0
    #allocation3 [shape = 'u8[4096]{0}', space=vmem, size = 0x1000, scoped, tag = 'input window, operand 0, single buffered']
    #allocation4 [shape = 's32[1]{0}', space=sflag, size = 0x4, scoped, tag = 'scoped memory for tpu_custom_call.1']
    #allocation5 [shape = 's32[1]{0}', space=sflag, size = 0x4, scoped, tag = 'scoped memory for tpu_custom_call.1']
    #allocation6 [shape = 'u8[1024]{0}', space=vmem, size = 0x400, scoped, tag = 'output window, operand 0, single buffered']
    %9 = vsyncpa [#allocation4], 0
    %10 = vsyncpa [#allocation5], 0
    // Predicated region
    $region2: #{tpu_custom_call.1} parent=1 // pred_check
      _
    $region3: #{tpu_custom_call.1} parent=1 // pred_check_branch
      %12 = sbr.rel (0) target = $region5
    $region4: #{tpu_custom_call.1} parent=1 // pred_region
      %s14 = ssub.s32 128, 128
      %15 = vsyncadd [#allocation4], %s14
      %s17 = sshll.u32 [#allocation3], 4
      %s18 = int_to_ptr.vmem [resolvable:$true] %s17
      %20 = dma.hbm_to_vmem [thread:$0]  %s0, 128, %s18, [#allocation4]
    $region5: #{tpu_custom_call.1} parent=1 // pred_fallthru
      _
    // Predicated region
    $region6: #{tpu_custom_call.1} parent=1 // pred_check
      _
    $region7: #{tpu_custom_call.1} parent=1 // pred_check_branch
      %22 = sbr.rel (0) target = $region9
    $region8: #{tpu_custom_call.1} parent=1 // pred_region
      _
    $region9: #{tpu_custom_call.1} parent=1 // pred_fallthru
      _
    // Predicated region
    $region10: #{tpu_custom_call.1} parent=1 // pred_check
      _
    $region11: #{tpu_custom_call.1} parent=1 // pred_check_branch
      %24 = sbr.rel (0) target = $region13
    $region12: #{tpu_custom_call.1} parent=1 // pred_region
      _
    $region13: #{tpu_custom_call.1} parent=1 // pred_fallthru
      _
    // Predicated region
    $region14: #{tpu_custom_call.1} parent=1 // pred_check
      _
    $region15: #{tpu_custom_call.1} parent=1 // pred_check_branch
      %26 = sbr.rel (0) target = $region17
    $region16: #{tpu_custom_call.1} parent=1 // pred_region
      %27 = dma.done [#allocation4], 128
    $region17: #{tpu_custom_call.1} parent=1 // pred_fallthru
      _
    %v28 = vld [vmem:[%s1] sm:$0x1]
    %v29 = vld [vmem:[#allocation3] sm:$0xff]
    %s30 = sld [smem:[#allocation2]]
    %v31 = vstv %s30
    %vm32 = vcmask 261120
    %v34 = vsel %vm32, %v28, 0
    %v37 = vsel %vm32, %v29, 0
    %39 = vmatprep.subr.mxu0 0.0
    %40 = vmatpush1.xpose.msra.mxu0 %v37
    %41 = vmatprep.subr.mxu0 0.0
    %42 = vmatpush1.xpose.msra.mxu0 0.0
    %43 = vmatprep.subr.mxu0 0.0
    %44 = vmatpush1.xpose.msra.mxu0 0.0
    %45 = vmatprep.subr.mxu0 0.0
    %46 = vmatpush1.xpose.msra.mxu0 0.0
    %47 = vmatprep.subr.mxu0 0.0
    %48 = vmatpush1.xpose.msra.mxu0 0.0
    %49 = vmatprep.subr.mxu0 0.0
    %50 = vmatpush1.xpose.msra.mxu0 0.0
    %51 = vmatprep.subr.mxu0 0.0
    %52 = vmatpush1.xpose.msra.mxu0 0.0
    %53 = vmatprep.subr.mxu0 0.0
    %54 = vmatpush1.xpose.msra.mxu0 0.0
    %55 = vmatprep.subr.mxu0 0.0
    %56 = vmatpush1.xpose.msra.mxu0 0.0
    %57 = vmatprep.subr.mxu0 0.0
    %58 = vmatpush1.xpose.msra.mxu0 0.0
    %59 = vmatprep.subr.mxu0 0.0
    %60 = vmatpush1.xpose.msra.mxu0 0.0
    %61 = vmatprep.subr.mxu0 0.0
    %62 = vmatpush1.xpose.msra.mxu0 0.0
    %63 = vmatprep.subr.mxu0 0.0
    %64 = vmatpush1.xpose.msra.mxu0 0.0
    %65 = vmatprep.subr.mxu0 0.0
    %66 = vmatpush1.xpose.msra.mxu0 0.0
    %67 = vmatprep.subr.mxu0 0.0
    %68 = vmatpush1.xpose.msra.mxu0 0.0
    %69 = vmatprep.subr.mxu0 0.0
    %70 = vmatpush1.xpose.msra.mxu0 0.0
    %71 = vmatprep.subr.mxu0 0.0
    %72 = vmatpush1.xpose.msra.mxu0 0.0
    %73 = vmatprep.subr.mxu0 0.0
    %74 = vmatpush1.xpose.msra.mxu0 0.0
    %75 = vmatprep.subr.mxu0 0.0
    %76 = vmatpush1.xpose.msra.mxu0 0.0
    %77 = vmatprep.subr.mxu0 0.0
    %78 = vmatpush1.xpose.msra.mxu0 0.0
    %79 = vmatprep.subr.mxu0 0.0
    %80 = vmatpush1.xpose.msra.mxu0 0.0
    %81 = vmatprep.subr.mxu0 0.0
    %82 = vmatpush1.xpose.msra.mxu0 0.0
    %83 = vmatprep.subr.mxu0 0.0
    %84 = vmatpush1.xpose.msra.mxu0 0.0
    %85 = vmatprep.subr.mxu0 0.0
    %86 = vmatpush1.xpose.msra.mxu0 0.0
    %87 = vmatprep.subr.mxu0 0.0
    %88 = vmatpush1.xpose.msra.mxu0 0.0
    %89 = vmatprep.subr.mxu0 0.0
    %90 = vmatpush1.xpose.msra.mxu0 0.0
    %91 = vmatprep.subr.mxu0 0.0
    %92 = vmatpush1.xpose.msra.mxu0 0.0
    %93 = vmatprep.subr.mxu0 0.0
    %94 = vmatpush1.xpose.msra.mxu0 0.0
    %95 = vmatprep.subr.mxu0 0.0
    %96 = vmatpush1.xpose.msra.mxu0 0.0
    %97 = vmatprep.subr.mxu0 0.0
    %98 = vmatpush1.xpose.msra.mxu0 0.0
    %99 = vmatprep.subr.mxu0 0.0
    %100 = vmatpush1.xpose.msra.mxu0 0.0
    %101 = vmatprep.subr.mxu0 0.0
    %102 = vmatpush1.xpose.msra.mxu0 0.0
    %103 = vmatprep.mubr.f32.mxu0 0.0
    %104 = vmatmul.mubr.f32.gmra.mrb[0].mxu0 %v34
    %v105 = vpop.f32.mrb[0].mxu0
    %v106 = vadd.f32 %v31, %v105
    %v107 = vpop.f32.mrb[0].mxu0
    %108 = vdwg.mxu0
    %v109 = vmax.f32 %v106, 0.0
    %v110 = vand.u32 2147483647, %v106
    %v111 = vsub.f32 0.0, %v110
    %v112 = vmul.f32 %v111, 1.442695
    %v113 = vpow.pop %v112
    %v114 = vadd.f32 %v113, 1.0
    %v115 = vlog2.pop %v114
    %v116 = vmul.f32 %v115, 0.6931472
    %v117 = vmul.f32 -0.5, %v113
    %v118 = vadd.f32 %v117, 1.0
    %v119 = vmul.f32 %v118, %v113
    %v120 = vand.u32 2147483647, %v113
    %vm121 = vcmp.lt.f32.partialorder %v120, 0.0004427343
    %v122 = vsel %vm121, %v119, %v116
    %v123 = vadd.f32 %v109, %v122
    %v124 = vsub.f32 0.0, %v123
    %v125 = vsub.f32 %v106, %v123
    %v127 = vrot.slane %v125, 7
    %vm129 = vcmask 1040384
    %v130 = vsel %vm129, %v124, %v127
    %vm131 = vcmask 58368
    %132 = vst.msk [vmem:[#allocation6] sm:$0x3] %vm131, %v130
    // Predicated region
    $region18: #{tpu_custom_call.1} parent=1 // pred_check
      _
    $region19: #{tpu_custom_call.1} parent=1 // pred_check_branch
      %134 = sbr.rel (0) target = $region21
    $region20: #{tpu_custom_call.1} parent=1 // pred_region
      %s136 = ssub.s32 32, 32
      %137 = vsyncadd [#allocation5], %s136
      %s139 = sshll.u32 [#allocation6], 4
      %s140 = int_to_ptr.vmem [resolvable:$true] %s139
      %142 = dma.vmem_to_hbm [thread:$0]  %s140, 32, %s3, [#allocation5]
    $region21: #{tpu_custom_call.1} parent=1 // pred_fallthru
      _
    // Predicated region
    $region22: #{tpu_custom_call.1} parent=1 // pred_check
      _
    $region23: #{tpu_custom_call.1} parent=1 // pred_check_branch
      %144 = sbr.rel (0) target = $region25
    $region24: #{tpu_custom_call.1} parent=1 // pred_region
      %145 = dma.done [#allocation5], 32
    $region25: #{tpu_custom_call.1} parent=1 // pred_fallthru
      _
    %146 = vsyncpa [#allocation4], 1
    %147 = vsyncpa [#allocation5], 1

</llo_original>
